<compile_context>
chip_gen: v7x
topology: tpu7x:2x2x1
jax: 0.10.0
libtpu: 0.0.40
codegen_flags: <defaults>
</compile_context>

<pallas_src>
import jax
import jax.numpy as jnp
from jax.experimental import pallas as pl
from jax.experimental.pallas import tpu as pltpu


def _round_up(n, m):
    return ((n + m - 1) // m) * m


def mlp_kernel(x_ref, w1_ref, b1_ref, w2_ref, b2_ref, o_ref):
    x = x_ref[...]                       # (TB, In)   In is tiny (e.g. 4)
    w1 = w1_ref[...]                     # (In, Hp)   Hp = 128-padded hidden
    tb = x.shape[0]
    in_dim = x.shape[1]
    hp = w1.shape[1]

    # ---- fc1 on the VPU: K = In broadcast multiply-adds, bias folded into init.
    h = jnp.broadcast_to(b1_ref[...], (tb, hp))           # (TB, Hp), lane-dense
    for k in range(in_dim):                               # static, tiny unroll
        h = h + x[:, k:k + 1] * w1[k:k + 1, :]

    # ---- LeakyReLU (negative_slope = 0.01, matching nn.LeakyReLU() default).
    # Padding lanes are 0 and stay 0 (0.01 * 0 == 0).
    h = jnp.where(h >= 0, h, 0.01 * h)

    # ---- fc2 on the MXU: (TB, Hp) @ (Hp, Cp), Hp and Cp multiples of 128.
    out = jnp.dot(h, w2_ref[...], preferred_element_type=jnp.float32)
    out = out + b2_ref[...]                                # (1, Cp) lane-dense add

    o_ref[...] = out.astype(o_ref.dtype)                   # unmasked lane-dense store


def neural_net_forward(x, w1, b1, w2, b2):
    """x: (B, In) f32; w1: (In, H); b1: (1, H); w2: (H, C); b2: (1, C)."""
    B, In = x.shape
    H = w1.shape[1]
    C = w2.shape[1]

    SUB, LANE = 8, 128
    TB_MAX = 512                        # rows per grid step for large batches

    Hp = _round_up(max(H, LANE), LANE)
    Cp = _round_up(max(C, LANE), LANE)
    Bp = _round_up(max(B, SUB), SUB)
    TB = min(TB_MAX, Bp)
    Bp = _round_up(Bp, TB)

    f32 = jnp.float32
    xp = jnp.pad(x.astype(f32), ((0, Bp - B), (0, 0)))
    w1p = jnp.pad(w1.astype(f32), ((0, 0), (0, Hp - H)))
    b1p = jnp.pad(b1.astype(f32), ((0, 0), (0, Hp - H)))
    w2p = jnp.pad(w2.astype(f32), ((0, Hp - H), (0, Cp - C)))
    b2p = jnp.pad(b2.astype(f32), ((0, 0), (0, Cp - C)))

    grid = (Bp // TB,)

    out_padded = pl.pallas_call(
        mlp_kernel,
        out_shape=jax.ShapeDtypeStruct((Bp, Cp), f32),
        grid=grid,
        in_specs=[
            # x: tiled over batch.
            pl.BlockSpec((TB, In), lambda i: (i, 0)),
            # weights / biases: same block every step -> stay VMEM-resident.
            pl.BlockSpec((In, Hp), lambda i: (0, 0)),
            pl.BlockSpec((1, Hp), lambda i: (0, 0)),
            pl.BlockSpec((Hp, Cp), lambda i: (0, 0)),
            pl.BlockSpec((1, Cp), lambda i: (0, 0)),
        ],
        out_specs=pl.BlockSpec((TB, Cp), lambda i: (i, 0)),
        compiler_params=pltpu.CompilerParams(
            dimension_semantics=("parallel",),
        ),
    )(xp, w1p, b1p, w2p, b2p)

    return out_padded[:B, :C]


def init_params(key, input_size, hidden_size, num_classes):
    """Deterministic init mimicking nn.Linear's uniform(-1/sqrt(fan_in), +)."""
    k1, k2, k3, k4 = jax.random.split(key, 4)
    bound1 = 1.0 / jnp.sqrt(jnp.float32(input_size))
    bound2 = 1.0 / jnp.sqrt(jnp.float32(hidden_size))
    w1 = jax.random.uniform(k1, (input_size, hidden_size), jnp.float32,
                            -bound1, bound1)
    b1 = jax.random.uniform(k2, (1, hidden_size), jnp.float32, -bound1, bound1)
    w2 = jax.random.uniform(k3, (hidden_size, num_classes), jnp.float32,
                            -bound2, bound2)
    b2 = jax.random.uniform(k4, (1, num_classes), jnp.float32, -bound2, bound2)
    return w1, b1, w2, b2


if __name__ == "__main__":
    # The module consumes the 4 sensor columns ['S1','S2','S3','S4'] -> input_size=4.
    input_size, hidden_size, num_classes = 4, 32, 3
    batch = 8

    key = jax.random.PRNGKey(0)
    kx, kp = jax.random.split(key)
    x = jax.random.normal(kx, (batch, input_size), jnp.float32)
    w1, b1, w2, b2 = init_params(kp, input_size, hidden_size, num_classes)

    out = neural_net_forward(x, w1, b1, w2, b2)
    out = jax.block_until_ready(out)

    # Pure-JAX reference of the same forward pass.
    h_ref = x @ w1 + b1
    h_ref = jnp.where(h_ref >= 0, h_ref, 0.01 * h_ref)
    ref = h_ref @ w2 + b2
    assert out.shape == (batch, num_classes)
    assert jnp.allclose(out, ref, atol=1e-5, rtol=1e-5)

    print("KERNEL_OK")
</pallas_src>

<mosaic_0001>
module attributes {stable_mosaic.version = 11 : i64} {
  func.func @mlp_kernel(%arg0: i32, %arg1: memref<8x4xf32, #tpu.memory_space<vmem>>, %arg2: memref<4x128xf32, #tpu.memory_space<vmem>>, %arg3: memref<1x128xf32, #tpu.memory_space<vmem>>, %arg4: memref<128x128xf32, #tpu.memory_space<vmem>>, %arg5: memref<1x128xf32, #tpu.memory_space<vmem>>, %arg6: memref<8x128xf32, #tpu.memory_space<vmem>>) attributes {dimension_semantics = [#tpu.dimension_semantics<parallel>], iteration_bounds = array<i64: 1>, scalar_prefetch = 0 : i64, scratch_operands = 0 : i64, tpu.core_type = #tpu.core_type<tc>, window_params = [{transform_indices = @transform_0, window_bounds = array<i64: 8, 4>}, {pipeline_mode = #tpu.pipeline_mode<synchronous>, transform_indices = @transform_1, window_bounds = array<i64: 4, 128>}, {pipeline_mode = #tpu.pipeline_mode<synchronous>, transform_indices = @transform_2, window_bounds = array<i64: 1, 128>}, {pipeline_mode = #tpu.pipeline_mode<synchronous>, transform_indices = @transform_3, window_bounds = array<i64: 128, 128>}, {pipeline_mode = #tpu.pipeline_mode<synchronous>, transform_indices = @transform_4, window_bounds = array<i64: 1, 128>}, {transform_indices = @transform_5, window_bounds = array<i64: 8, 128>}]} {
    %c0 = arith.constant 0 : index
    %c0_0 = arith.constant 0 : index
    %0 = vector.load %arg1[%c0, %c0_0] : memref<8x4xf32, #tpu.memory_space<vmem>>, vector<8x4xf32>
    %c0_1 = arith.constant 0 : index
    %c0_2 = arith.constant 0 : index
    %1 = vector.load %arg2[%c0_1, %c0_2] : memref<4x128xf32, #tpu.memory_space<vmem>>, vector<4x128xf32>
    %c0_3 = arith.constant 0 : index
    %c0_4 = arith.constant 0 : index
    %2 = vector.load %arg3[%c0_3, %c0_4] : memref<1x128xf32, #tpu.memory_space<vmem>>, vector<1x128xf32>
    %3 = vector.shape_cast %2 : vector<1x128xf32> to vector<1x128xf32>
    %4 = vector.broadcast %3 : vector<1x128xf32> to vector<8x128xf32>
    %5 = vector.extract_strided_slice %0 {offsets = [0, 0], sizes = [8, 1], strides = [1, 1]} : vector<8x4xf32> to vector<8x1xf32>
    %6 = vector.extract_strided_slice %1 {offsets = [0, 0], sizes = [1, 128], strides = [1, 1]} : vector<4x128xf32> to vector<1x128xf32>
    %7 = vector.broadcast %5 : vector<8x1xf32> to vector<8x128xf32>
    %8 = vector.broadcast %6 : vector<1x128xf32> to vector<8x128xf32>
    %9 = arith.mulf %7, %8 : vector<8x128xf32>
    %10 = arith.addf %4, %9 : vector<8x128xf32>
    %11 = vector.extract_strided_slice %0 {offsets = [0, 1], sizes = [8, 1], strides = [1, 1]} : vector<8x4xf32> to vector<8x1xf32>
    %12 = vector.extract_strided_slice %1 {offsets = [1, 0], sizes = [1, 128], strides = [1, 1]} : vector<4x128xf32> to vector<1x128xf32>
    %13 = vector.broadcast %11 : vector<8x1xf32> to vector<8x128xf32>
    %14 = vector.broadcast %12 : vector<1x128xf32> to vector<8x128xf32>
    %15 = arith.mulf %13, %14 : vector<8x128xf32>
    %16 = arith.addf %10, %15 : vector<8x128xf32>
    %17 = vector.extract_strided_slice %0 {offsets = [0, 2], sizes = [8, 1], strides = [1, 1]} : vector<8x4xf32> to vector<8x1xf32>
    %18 = vector.extract_strided_slice %1 {offsets = [2, 0], sizes = [1, 128], strides = [1, 1]} : vector<4x128xf32> to vector<1x128xf32>
    %19 = vector.broadcast %17 : vector<8x1xf32> to vector<8x128xf32>
    %20 = vector.broadcast %18 : vector<1x128xf32> to vector<8x128xf32>
    %21 = arith.mulf %19, %20 : vector<8x128xf32>
    %22 = arith.addf %16, %21 : vector<8x128xf32>
    %23 = vector.extract_strided_slice %0 {offsets = [0, 3], sizes = [8, 1], strides = [1, 1]} : vector<8x4xf32> to vector<8x1xf32>
    %24 = vector.extract_strided_slice %1 {offsets = [3, 0], sizes = [1, 128], strides = [1, 1]} : vector<4x128xf32> to vector<1x128xf32>
    %25 = vector.broadcast %23 : vector<8x1xf32> to vector<8x128xf32>
    %26 = vector.broadcast %24 : vector<1x128xf32> to vector<8x128xf32>
    %27 = arith.mulf %25, %26 : vector<8x128xf32>
    %28 = arith.addf %22, %27 : vector<8x128xf32>
    %cst = arith.constant 0.000000e+00 : f32
    %29 = vector.broadcast %cst : f32 to vector<8x128xf32>
    %30 = arith.cmpf oge, %28, %29 : vector<8x128xf32>
    %cst_5 = arith.constant 0.00999999977 : f32
    %31 = vector.broadcast %cst_5 : f32 to vector<8x128xf32>
    %32 = arith.mulf %31, %28 : vector<8x128xf32>
    %33 = arith.select %30, %28, %32 : vector<8x128xi1>, vector<8x128xf32>
    %c0_6 = arith.constant 0 : index
    %c0_7 = arith.constant 0 : index
    %34 = vector.load %arg4[%c0_6, %c0_7] : memref<128x128xf32, #tpu.memory_space<vmem>>, vector<128x128xf32>
    %cst_8 = arith.constant dense<0.000000e+00> : vector<8x128xf32>
    %35 = tpu.matmul %33, %34, %cst_8 {dimension_numbers = #tpu.dot_dimension_numbers<[1], [0], [0], [1], [0, 0, 1, 1], [], []>} : vector<8x128xf32>, vector<128x128xf32>, vector<8x128xf32> -> vector<8x128xf32>
    %c0_9 = arith.constant 0 : index
    %c0_10 = arith.constant 0 : index
    %36 = vector.load %arg5[%c0_9, %c0_10] : memref<1x128xf32, #tpu.memory_space<vmem>>, vector<1x128xf32>
    %37 = vector.broadcast %36 : vector<1x128xf32> to vector<8x128xf32>
    %38 = arith.addf %35, %37 : vector<8x128xf32>
    %c0_11 = arith.constant 0 : index
    %c0_12 = arith.constant 0 : index
    %39 = vector.load %arg6[%c0_11, %c0_12] : memref<8x128xf32, #tpu.memory_space<vmem>>, vector<8x128xf32>
    tpu.vector_store %arg6[%c0_11, %c0_12], %38 {strides = array<i32>} : memref<8x128xf32, #tpu.memory_space<vmem>>, vector<8x128xf32>,
    return
  }
  func.func @transform_0(%arg0: i32) -> (i32, i32) {
    %c0_i32 = arith.constant 0 : i32
    %c0_i32_0 = arith.constant 0 : i32
    return %arg0, %c0_i32 : i32, i32
  }
  func.func @transform_1(%arg0: i32) -> (i32, i32) {
    %c0_i32 = arith.constant 0 : i32
    %c0_i32_0 = arith.constant 0 : i32
    %c0_i32_1 = arith.constant 0 : i32
    return %c0_i32, %c0_i32_0 : i32, i32
  }
  func.func @transform_2(%arg0: i32) -> (i32, i32) {
    %c0_i32 = arith.constant 0 : i32
    %c0_i32_0 = arith.constant 0 : i32
    %c0_i32_1 = arith.constant 0 : i32
    return %c0_i32, %c0_i32_0 : i32, i32
  }
  func.func @transform_3(%arg0: i32) -> (i32, i32) {
    %c0_i32 = arith.constant 0 : i32
    %c0_i32_0 = arith.constant 0 : i32
    %c0_i32_1 = arith.constant 0 : i32
    return %c0_i32, %c0_i32_0 : i32, i32
  }
  func.func @transform_4(%arg0: i32) -> (i32, i32) {
    %c0_i32 = arith.constant 0 : i32
    %c0_i32_0 = arith.constant 0 : i32
    %c0_i32_1 = arith.constant 0 : i32
    return %c0_i32, %c0_i32_0 : i32, i32
  }
  func.func @transform_5(%arg0: i32) -> (i32, i32) {
    %c0_i32 = arith.constant 0 : i32
    %c0_i32_0 = arith.constant 0 : i32
    return %arg0, %c0_i32 : i32, i32
  }
}

</mosaic_0001>

<llo_original>
// kernel: tpu_custom_call.1
$region0: #{tpu_custom_call.1}
  #allocation0 [shape = 'u32[]', space=smem, size = 0x4, offset = 0x4, fixed_abs, tag = 'smem constant byte address 0x4 - core index']
  #allocation1 [shape = 'u32[144,128]{1,0:T(1,128)}', space=vmem, size = 0x12000, scoped, tag = 'internal scratch']
  %s0 = inlined_call_operand.vmem [shape: f32[8,4], index: 0, kind: input, shape index: {}]
  %s1 = inlined_call_operand.vmem [shape: f32[4,128], index: 1, kind: input, shape index: {}]
  %s2 = inlined_call_operand.vmem [shape: f32[1,128], index: 2, kind: input, shape index: {}]
  %s3 = inlined_call_operand.hbm [shape: f32[128,128], index: 3, kind: input, shape index: {}]
  %s4 = inlined_call_operand.vmem [shape: f32[1,128], index: 4, kind: input, shape index: {}]
  %s5 = inlined_call_operand.hbm [shape: f32[8,128], index: 5, kind: output, shape index: {}]
  %s6 = sld [smem:[#allocation0]]
  $region34: #{tpu_custom_call.1} parent=0
    _
  %s8 = ssub.s32 1, %s6
  %s9 = scalar_select 0, %s8, %s6
  $region1: #{tpu_custom_call.1} parent=0
    #allocation2 [shape = 'u8[65536]{0}', space=vmem, size = 0x10000, scoped, tag = 'input window, operand 3, single buffered']
    #allocation3 [shape = 's32[1]{0}', space=sflag, size = 0x4, scoped, tag = 'scoped memory for tpu_custom_call.1']
    #allocation4 [shape = 's32[1]{0}', space=sflag, size = 0x4, scoped, tag = 'scoped memory for tpu_custom_call.1']
    #allocation5 [shape = 'u8[4096]{0}', space=vmem, size = 0x1000, scoped, tag = 'output window, operand 0, single buffered']
    %10 = vsyncpa [#allocation3], 0
    %11 = vsyncpa [#allocation4], 0
    // Predicated region
    $region2: #{tpu_custom_call.1} parent=1 // pred_check
      _
    $region3: #{tpu_custom_call.1} parent=1 // pred_check_branch
      %13 = sbr.rel (0) target = $region5
    $region4: #{tpu_custom_call.1} parent=1 // pred_region
      _
    $region5: #{tpu_custom_call.1} parent=1 // pred_fallthru
      _
    // Predicated region
    $region6: #{tpu_custom_call.1} parent=1 // pred_check
      _
    $region7: #{tpu_custom_call.1} parent=1 // pred_check_branch
      %15 = sbr.rel (0) target = $region9
    $region8: #{tpu_custom_call.1} parent=1 // pred_region
      _
    $region9: #{tpu_custom_call.1} parent=1 // pred_fallthru
      _
    // Predicated region
    $region10: #{tpu_custom_call.1} parent=1 // pred_check
      _
    $region11: #{tpu_custom_call.1} parent=1 // pred_check_branch
      %17 = sbr.rel (0) target = $region13
    $region12: #{tpu_custom_call.1} parent=1 // pred_region
      _
    $region13: #{tpu_custom_call.1} parent=1 // pred_fallthru
      _
    // Predicated region
    $region14: #{tpu_custom_call.1} parent=1 // pred_check
      _
    $region15: #{tpu_custom_call.1} parent=1 // pred_check_branch
      %19 = sbr.rel (0) target = $region17
    $region16: #{tpu_custom_call.1} parent=1 // pred_region
      %s21 = ssub.s32 2048, 2048
      %22 = vsyncadd [#allocation3], %s21
      %s23 = sshll.u32 [#allocation2], 4
      %s24 = int_to_ptr.vmem [resolvable:$true] %s23
      %29 = dma.hbm_to_vmem [thread:$0]  %s3, 2048, %s24, [#allocation3], 128, 128, 8
    $region17: #{tpu_custom_call.1} parent=1 // pred_fallthru
      _
    // Predicated region
    $region18: #{tpu_custom_call.1} parent=1 // pred_check
      _
    $region19: #{tpu_custom_call.1} parent=1 // pred_check_branch
      %31 = sbr.rel (0) target = $region21
    $region20: #{tpu_custom_call.1} parent=1 // pred_region
      _
    $region21: #{tpu_custom_call.1} parent=1 // pred_fallthru
      _
    // Predicated region
    $region22: #{tpu_custom_call.1} parent=1 // pred_check
      _
    $region23: #{tpu_custom_call.1} parent=1 // pred_check_branch
      %33 = sbr.rel (0) target = $region25
    $region24: #{tpu_custom_call.1} parent=1 // pred_region
      %34 = dma.done [#allocation3], 2048
    $region25: #{tpu_custom_call.1} parent=1 // pred_fallthru
      _
    %v35 = vld [vmem:[%s0] sm:$0xff]
    %v36 = vld [vmem:[%s1] sm:$0xf]
    %v37 = vld [vmem:[%s2] sm:$0x1]
    %v39 = vlaneseq
    %v40 = vshrl.u32 %v39, 7
    %v41 = vsub.s32 0, %v40
    %v42 = vrot.slane %v37, %v41
    %45 = vset.pattern.permute.xlu0 0
    %46 = vperm.xlu0 %45, %v35
    %v47 = vpop.permute.xlu0 %46
    %v49 = vlaneseq
    %v50 = vshrl.u32 %v49, 7
    %v51 = vsub.s32 0, %v50
    %v52 = vrot.slane %v36, %v51
    %v53 = vmul.f32 %v47, %v52
    %v54 = vadd.f32 %v42, %v53
    %55 = vset.pattern.permute.xlu0 1
    %56 = vperm.xlu0 %55, %v35
    %v57 = vpop.permute.xlu0 %56
    %v59 = vlaneseq
    %v60 = vshrl.u32 %v59, 7
    %v61 = vsub.s32 1, %v60
    %v62 = vrot.slane %v36, %v61
    %v63 = vmul.f32 %v57, %v62
    %v64 = vadd.f32 %v54, %v63
    %65 = vset.pattern.permute.xlu0 2
    %66 = vperm.xlu0 %65, %v35
    %v67 = vpop.permute.xlu0 %66
    %v69 = vlaneseq
    %v70 = vshrl.u32 %v69, 7
    %v71 = vsub.s32 2, %v70
    %v72 = vrot.slane %v36, %v71
    %v73 = vmul.f32 %v67, %v72
    %v74 = vadd.f32 %v64, %v73
    %75 = vset.pattern.permute.xlu0 3
    %76 = vperm.xlu0 %75, %v35
    %v77 = vpop.permute.xlu0 %76
    %v79 = vlaneseq
    %v80 = vshrl.u32 %v79, 7
    %v81 = vsub.s32 3, %v80
    %v82 = vrot.slane %v36, %v81
    %v83 = vmul.f32 %v77, %v82
    %v84 = vadd.f32 %v74, %v83
    %vm85 = vcmp.ge.f32.partialorder %v84, 0.0
    %v86 = vmul.f32 %v84, 0.01
    %v87 = vsel %vm85, %v84, %v86
    %v88 = vld [vmem:[#allocation2] sm:$0xff]
    %v89 = vld [vmem:[#allocation2 + $0x8] sm:$0xff]
    %v90 = vld [vmem:[#allocation2 + $0x10] sm:$0xff]
    %v91 = vld [vmem:[#allocation2 + $0x18] sm:$0xff]
    %v92 = vld [vmem:[#allocation2 + $0x20] sm:$0xff]
    %v93 = vld [vmem:[#allocation2 + $0x28] sm:$0xff]
    %v94 = vld [vmem:[#allocation2 + $0x30] sm:$0xff]
    %v95 = vld [vmem:[#allocation2 + $0x38] sm:$0xff]
    %v96 = vld [vmem:[#allocation2 + $0x40] sm:$0xff]
    %v97 = vld [vmem:[#allocation2 + $0x48] sm:$0xff]
    %v98 = vld [vmem:[#allocation2 + $0x50] sm:$0xff]
    %v99 = vld [vmem:[#allocation2 + $0x58] sm:$0xff]
    %v100 = vld [vmem:[#allocation2 + $0x60] sm:$0xff]
    %v101 = vld [vmem:[#allocation2 + $0x68] sm:$0xff]
    %v102 = vld [vmem:[#allocation2 + $0x70] sm:$0xff]
    %v103 = vld [vmem:[#allocation2 + $0x78] sm:$0xff]
    %v104 = vld [vmem:[%s4] sm:$0x1]
    %v106 = vlaneseq
    %v107 = vshrl.u32 %v106, 7
    %v108 = vsub.s32 0, %v107
    %v109 = vrot.slane %v104, %v108
    %111 = vmatprep.subr.mxu0 0.0
    %112 = vmatpush1.msra.mxu0 %v88
    %113 = vmatprep.subr.mxu0 0.0
    %114 = vmatpush1.msra.mxu0 %v89
    %115 = vmatprep.subr.mxu0 0.0
    %116 = vmatpush1.msra.mxu0 %v90
    %117 = vmatprep.subr.mxu0 0.0
    %118 = vmatpush1.msra.mxu0 %v91
    %119 = vmatprep.subr.mxu0 0.0
    %120 = vmatpush1.msra.mxu0 %v92
    %121 = vmatprep.subr.mxu0 0.0
    %122 = vmatpush1.msra.mxu0 %v93
    %123 = vmatprep.subr.mxu0 0.0
    %124 = vmatpush1.msra.mxu0 %v94
    %125 = vmatprep.subr.mxu0 0.0
    %126 = vmatpush1.msra.mxu0 %v95
    %127 = vmatprep.subr.mxu0 0.0
    %128 = vmatpush1.msra.mxu0 %v96
    %129 = vmatprep.subr.mxu0 0.0
    %130 = vmatpush1.msra.mxu0 %v97
    %131 = vmatprep.subr.mxu0 0.0
    %132 = vmatpush1.msra.mxu0 %v98
    %133 = vmatprep.subr.mxu0 0.0
    %134 = vmatpush1.msra.mxu0 %v99
    %135 = vmatprep.subr.mxu0 0.0
    %136 = vmatpush1.msra.mxu0 %v100
    %137 = vmatprep.subr.mxu0 0.0
    %138 = vmatpush1.msra.mxu0 %v101
    %139 = vmatprep.subr.mxu0 0.0
    %140 = vmatpush1.msra.mxu0 %v102
    %141 = vmatprep.subr.mxu0 0.0
    %142 = vmatpush1.msra.mxu0 %v103
    %143 = vmatprep.subr.mxu0 0.0
    %144 = vmatpush1.msra.mxu0 0.0
    %145 = vmatprep.subr.mxu0 0.0
    %146 = vmatpush1.msra.mxu0 0.0
    %147 = vmatprep.subr.mxu0 0.0
    %148 = vmatpush1.msra.mxu0 0.0
    %149 = vmatprep.subr.mxu0 0.0
    %150 = vmatpush1.msra.mxu0 0.0
    %151 = vmatprep.subr.mxu0 0.0
    %152 = vmatpush1.msra.mxu0 0.0
    %153 = vmatprep.subr.mxu0 0.0
    %154 = vmatpush1.msra.mxu0 0.0
    %155 = vmatprep.subr.mxu0 0.0
    %156 = vmatpush1.msra.mxu0 0.0
    %157 = vmatprep.subr.mxu0 0.0
    %158 = vmatpush1.msra.mxu0 0.0
    %159 = vmatprep.subr.mxu0 0.0
    %160 = vmatpush1.msra.mxu0 0.0
    %161 = vmatprep.subr.mxu0 0.0
    %162 = vmatpush1.msra.mxu0 0.0
    %163 = vmatprep.subr.mxu0 0.0
    %164 = vmatpush1.msra.mxu0 0.0
    %165 = vmatprep.subr.mxu0 0.0
    %166 = vmatpush1.msra.mxu0 0.0
    %167 = vmatprep.subr.mxu0 0.0
    %168 = vmatpush1.msra.mxu0 0.0
    %169 = vmatprep.subr.mxu0 0.0
    %170 = vmatpush1.msra.mxu0 0.0
    %171 = vmatprep.subr.mxu0 0.0
    %172 = vmatpush1.msra.mxu0 0.0
    %173 = vmatprep.subr.mxu0 0.0
    %174 = vmatpush1.msra.mxu0 0.0
    %175 = vmatprep.mubr.f32.mxu0 0.0
    %176 = vmatmul.mubr.f32.gmra.mrb[0].mxu0 %v87
    %v177 = vpop.f32.mrb[0].mxu0
    %v178 = vadd.f32 %v109, %v177
    %v179 = vpop.f32.mrb[0].mxu0
    %180 = vdwg.mxu0
    %181 = vst [vmem:[#allocation5] sm:$0xff] %v178
    // Predicated region
    $region26: #{tpu_custom_call.1} parent=1 // pred_check
      _
    $region27: #{tpu_custom_call.1} parent=1 // pred_check_branch
      %183 = sbr.rel (0) target = $region29
    $region28: #{tpu_custom_call.1} parent=1 // pred_region
      %s185 = ssub.s32 128, 128
      %186 = vsyncadd [#allocation4], %s185
      %s188 = sshll.u32 [#allocation5], 4
      %s189 = int_to_ptr.vmem [resolvable:$true] %s188
      %191 = dma.vmem_to_hbm [thread:$0]  %s189, 128, %s5, [#allocation4]
    $region29: #{tpu_custom_call.1} parent=1 // pred_fallthru
      _
    // Predicated region
    $region30: #{tpu_custom_call.1} parent=1 // pred_check
      _
    $region31: #{tpu_custom_call.1} parent=1 // pred_check_branch
      %193 = sbr.rel (0) target = $region33
    $region32: #{tpu_custom_call.1} parent=1 // pred_region
      %194 = dma.done [#allocation4], 128
    $region33: #{tpu_custom_call.1} parent=1 // pred_fallthru
      _
    %195 = vsyncpa [#allocation3], 1
    %196 = vsyncpa [#allocation4], 1

</llo_original>
